<compile_context>
chip_gen: v7x
topology: tpu7x:2x2x1
jax: 0.10.0
libtpu: 0.0.40
codegen_flags: <defaults>
</compile_context>

<pallas_src>
import jax
import jax.numpy as jnp
from jax.experimental import pallas as pl
from jax.experimental.pallas import tpu as pltpu


def _round_up(n, m):
    return ((n + m - 1) // m) * m


def _choose_block_b(B):
    """Batch tile: multiple of 16; >=2 tiles for non-trivial B (feeds both v7x TCs)."""
    if B <= 32:
        # Tiny batch: one tile (call is overhead-dominated anyway).
        return max(16, _round_up(B, 16))
    if B <= 8192:
        # Exactly 2 tiles: pipeline overlap + both TensorCores busy on v7x.
        return _round_up(pl.cdiv(B, 2), 16)
    # Very large batch: 4 MiB f32 x tiles, deep pipeline, fits every generation's VMEM.
    return 4096


def _mlp_kernel(x_ref, w1_ref, b1_ref, w2_ref, b2_ref, w3_ref, b3_ref, o_ref):
    # Cast the streamed x tile to bf16 in-kernel (VPU cast hides under the DMA).
    x = x_ref[...].astype(jnp.bfloat16)                                    # (bb, 256)
    # fc1: bf16 x bf16 on the MXU, f32 accumulation.
    h1 = jnp.dot(x, w1_ref[...], preferred_element_type=jnp.float32) + b1_ref[...]
    h1 = jnp.maximum(h1, 0.0).astype(jnp.bfloat16)                         # (bb, 128)
    # fc2: bf16 x bf16 on the MXU, f32 accumulation.
    h2 = jnp.dot(h1, w2_ref[...], preferred_element_type=jnp.float32) + b2_ref[...]
    h2 = jnp.maximum(h2, 0.0).astype(jnp.bfloat16)                         # (bb, 64)
    # fc3 (N = 1) on the MXU (it has huge slack) instead of an XLU cross-lane reduce.
    out = jnp.dot(h2, w3_ref[...], preferred_element_type=jnp.float32) + b3_ref[0, 0]
    o_ref[...] = out.astype(o_ref.dtype)                                   # (bb, 1)


def value_predictor_forward(x, params, *, block_b=None):
    """x: [B, 256] (f32 or bf16). params: w1,b1,w2,b2,w3,b3 with weights stored [in, out]."""
    B, Fin = x.shape
    assert Fin == 256
    if block_b is None:
        block_b = _choose_block_b(B)
    assert block_b % 8 == 0, "block_b must be a multiple of 8 (sublane tiling)"

    num_tiles = pl.cdiv(B, block_b)   # ragged tail handled by Pallas boundary blocks

    # Resident bf16 weights / f32 biases (tiny; one-time cast, constant-folded under jit).
    w1 = params["w1"].astype(jnp.bfloat16)                    # (256, 128)
    b1 = params["b1"].astype(jnp.float32)                     # (1, 128)
    w2 = params["w2"].astype(jnp.bfloat16)                    # (128, 64)
    b2 = params["b2"].astype(jnp.float32)                     # (1, 64)
    w3 = params["w3"].reshape(64, 1).astype(jnp.bfloat16)     # (64, 1)  MXU column
    b3 = params["b3"].reshape(1, 1).astype(jnp.float32)       # (1, 1)   SMEM scalar

    # Weights / biases use a constant block index => DMA'd once and kept resident.
    def rep(shape):
        return pl.BlockSpec(shape, lambda i: (0, 0))

    flops = 2 * B * (256 * 128 + 128 * 64 + 64 * 1)
    bytes_accessed = (
        B * 256 * x.dtype.itemsize                       # x stream (dominant)
        + (256 * 128 + 128 * 64 + 64) * 2                # bf16 weights
        + (128 + 64 + 1) * 4                             # f32 biases
        + B * 4                                          # output
    )

    out = pl.pallas_call(
        _mlp_kernel,
        out_shape=jax.ShapeDtypeStruct((B, 1), jnp.float32),
        grid_spec=pltpu.PrefetchScalarGridSpec(
            num_scalar_prefetch=0,
            grid=(num_tiles,),
            in_specs=[
                pl.BlockSpec((block_b, 256), lambda i: (i, 0)),     # x tile (streamed, native dtype)
                rep((256, 128)), rep((1, 128)),                     # fc1
                rep((128, 64)),  rep((1, 64)),                      # fc2
                rep((64, 1)),                                       # fc3 weight column
                pl.BlockSpec(memory_space=pltpu.MemorySpace.SMEM),  # fc3 bias scalar
            ],
            out_specs=pl.BlockSpec((block_b, 1), lambda i: (i, 0)),
        ),
        compiler_params=pltpu.CompilerParams(
            dimension_semantics=("parallel",),        # batch tiles independent (v7x megacore)
            vmem_limit_bytes=32 * 1024 * 1024,        # 4096-row f32 tiles fit even on v5e
        ),
        cost_estimate=pl.CostEstimate(
            flops=flops, transcendentals=0, bytes_accessed=bytes_accessed),
    )(x, w1, b1, w2, b2, w3, b3)
    return out


def init_params(key):
    """Deterministic synthetic params matching nn.Linear(256,128)/(128,64)/(64,1).
    Weights stored [in, out] (transpose of PyTorch's [out, in]); biases 2D [1, out]."""
    k1, k2, k3, k4, k5, k6 = jax.random.split(key, 6)

    def lin(kw, kb, fan_in, fan_out):
        bound = 1.0 / jnp.sqrt(fan_in)
        w = jax.random.uniform(kw, (fan_in, fan_out), jnp.float32, -bound, bound)
        b = jax.random.uniform(kb, (1, fan_out), jnp.float32, -bound, bound)
        return w, b

    w1, b1 = lin(k1, k2, 256, 128)
    w2, b2 = lin(k3, k4, 128, 64)
    w3, b3 = lin(k5, k6, 64, 1)
    return {"w1": w1, "b1": b1, "w2": w2, "b2": b2, "w3": w3, "b3": b3}


def reference_forward(x, p):
    """Pure-JAX reference matching the kernel's numerics (bf16 operands, f32 accumulation)."""
    xb = x.astype(jnp.bfloat16)
    w1 = p["w1"].astype(jnp.bfloat16)
    w2 = p["w2"].astype(jnp.bfloat16)
    w3 = p["w3"].reshape(64, 1).astype(jnp.bfloat16)
    h1 = jnp.maximum(jnp.dot(xb, w1, preferred_element_type=jnp.float32) + p["b1"], 0.0)
    h2 = jnp.maximum(
        jnp.dot(h1.astype(jnp.bfloat16), w2, preferred_element_type=jnp.float32) + p["b2"], 0.0)
    return jnp.dot(h2.astype(jnp.bfloat16), w3,
                   preferred_element_type=jnp.float32) + p["b3"].reshape(1, 1)


if __name__ == "__main__":
    key = jax.random.PRNGKey(0)
    kx, kp, kx2 = jax.random.split(key, 3)
    params = init_params(kp)

    # Small demo batch (single tile, ragged boundary block: block_b=16 covers 8 rows).
    B = 8
    x = jax.random.normal(kx, (B, 256), jnp.float32)
    out = jax.block_until_ready(value_predictor_forward(x, params))
    ref = reference_forward(x, params)
    assert out.shape == (B, 1)
    assert jnp.allclose(out, ref, atol=2e-3, rtol=2e-3), "mismatch vs reference (small batch)"

    # Larger batch exercising the 2-tile pipelined path with a partial last block (no jnp.pad).
    B2 = 1800
    x2 = jax.random.normal(kx2, (B2, 256), jnp.float32)
    out2 = jax.block_until_ready(value_predictor_forward(x2, params))
    ref2 = reference_forward(x2, params)
    assert out2.shape == (B2, 1)
    assert jnp.allclose(out2, ref2, atol=2e-3, rtol=2e-3), "mismatch vs reference (tiled batch)"

    print("KERNEL_OK")
</pallas_src>

<mosaic_0001>
module attributes {stable_mosaic.version = 11 : i64} {
  func.func @_mlp_kernel(%arg0: i32, %arg1: memref<16x256xf32, #tpu.memory_space<vmem>>, %arg2: memref<256x128xbf16, #tpu.memory_space<vmem>>, %arg3: memref<1x128xf32, #tpu.memory_space<vmem>>, %arg4: memref<128x64xbf16, #tpu.memory_space<vmem>>, %arg5: memref<1x64xf32, #tpu.memory_space<vmem>>, %arg6: memref<64x1xbf16, #tpu.memory_space<vmem>>, %arg7: memref<1x1xf32, #tpu.memory_space<smem>>, %arg8: memref<16x1xf32, #tpu.memory_space<vmem>>) attributes {dimension_semantics = [#tpu.dimension_semantics<parallel>], iteration_bounds = array<i64: 1>, scalar_prefetch = 0 : i64, scratch_operands = 0 : i64, tpu.core_type = #tpu.core_type<tc>, window_params = [{transform_indices = @transform_0, window_bounds = array<i64: 16, 256>}, {pipeline_mode = #tpu.pipeline_mode<synchronous>, transform_indices = @transform_1, window_bounds = array<i64: 256, 128>}, {pipeline_mode = #tpu.pipeline_mode<synchronous>, transform_indices = @transform_2, window_bounds = array<i64: 1, 128>}, {pipeline_mode = #tpu.pipeline_mode<synchronous>, transform_indices = @transform_3, window_bounds = array<i64: 128, 64>}, {pipeline_mode = #tpu.pipeline_mode<synchronous>, transform_indices = @transform_4, window_bounds = array<i64: 1, 64>}, {pipeline_mode = #tpu.pipeline_mode<synchronous>, transform_indices = @transform_5, window_bounds = array<i64: 64, 1>}, {transform_indices = @transform_6, window_bounds = array<i64: 1, 1>}, {transform_indices = @transform_7, window_bounds = array<i64: 16, 1>}]} {
    %c0 = arith.constant 0 : index
    %c0_0 = arith.constant 0 : index
    %0 = vector.load %arg1[%c0, %c0_0] : memref<16x256xf32, #tpu.memory_space<vmem>>, vector<16x256xf32>
    %1 = arith.truncf %0 : vector<16x256xf32> to vector<16x256xbf16>
    %c0_1 = arith.constant 0 : index
    %c0_2 = arith.constant 0 : index
    %2 = vector.load %arg2[%c0_1, %c0_2] : memref<256x128xbf16, #tpu.memory_space<vmem>>, vector<256x128xbf16>
    %cst = arith.constant dense<0.000000e+00> : vector<16x128xf32>
    %3 = tpu.matmul %1, %2, %cst {dimension_numbers = #tpu.dot_dimension_numbers<[1], [0], [0], [1], [0, 0, 1, 1], [], []>} : vector<16x256xbf16>, vector<256x128xbf16>, vector<16x128xf32> -> vector<16x128xf32>
    %c0_3 = arith.constant 0 : index
    %c0_4 = arith.constant 0 : index
    %4 = vector.load %arg3[%c0_3, %c0_4] : memref<1x128xf32, #tpu.memory_space<vmem>>, vector<1x128xf32>
    %5 = vector.broadcast %4 : vector<1x128xf32> to vector<16x128xf32>
    %6 = arith.addf %3, %5 : vector<16x128xf32>
    %cst_5 = arith.constant 0.000000e+00 : f32
    %7 = vector.broadcast %cst_5 : f32 to vector<16x128xf32>
    %8 = arith.maximumf %6, %7 : vector<16x128xf32>
    %9 = arith.truncf %8 : vector<16x128xf32> to vector<16x128xbf16>
    %c0_6 = arith.constant 0 : index
    %c0_7 = arith.constant 0 : index
    %10 = vector.load %arg4[%c0_6, %c0_7] : memref<128x64xbf16, #tpu.memory_space<vmem>>, vector<128x64xbf16>
    %cst_8 = arith.constant dense<0.000000e+00> : vector<16x64xf32>
    %11 = tpu.matmul %9, %10, %cst_8 {dimension_numbers = #tpu.dot_dimension_numbers<[1], [0], [0], [1], [0, 0, 1, 1], [], []>} : vector<16x128xbf16>, vector<128x64xbf16>, vector<16x64xf32> -> vector<16x64xf32>
    %c0_9 = arith.constant 0 : index
    %c0_10 = arith.constant 0 : index
    %12 = vector.load %arg5[%c0_9, %c0_10] : memref<1x64xf32, #tpu.memory_space<vmem>>, vector<1x64xf32>
    %13 = vector.broadcast %12 : vector<1x64xf32> to vector<16x64xf32>
    %14 = arith.addf %11, %13 : vector<16x64xf32>
    %cst_11 = arith.constant 0.000000e+00 : f32
    %15 = vector.broadcast %cst_11 : f32 to vector<16x64xf32>
    %16 = arith.maximumf %14, %15 : vector<16x64xf32>
    %17 = arith.truncf %16 : vector<16x64xf32> to vector<16x64xbf16>
    %c0_12 = arith.constant 0 : index
    %c0_13 = arith.constant 0 : index
    %18 = vector.load %arg6[%c0_12, %c0_13] : memref<64x1xbf16, #tpu.memory_space<vmem>>, vector<64x1xbf16>
    %cst_14 = arith.constant dense<0.000000e+00> : vector<16x1xf32>
    %19 = tpu.matmul %17, %18, %cst_14 {dimension_numbers = #tpu.dot_dimension_numbers<[1], [0], [0], [1], [0, 0, 1, 1], [], []>} : vector<16x64xbf16>, vector<64x1xbf16>, vector<16x1xf32> -> vector<16x1xf32>
    %c0_15 = arith.constant 0 : index
    %c0_16 = arith.constant 0 : index
    %20 = memref.load %arg7[%c0_15, %c0_16] : memref<1x1xf32, #tpu.memory_space<smem>>
    %21 = vector.broadcast %20 : f32 to vector<16x1xf32>
    %22 = arith.addf %19, %21 : vector<16x1xf32>
    %c0_17 = arith.constant 0 : index
    %c0_18 = arith.constant 0 : index
    %23 = vector.load %arg8[%c0_17, %c0_18] : memref<16x1xf32, #tpu.memory_space<vmem>>, vector<16x1xf32>
    tpu.vector_store %arg8[%c0_17, %c0_18], %22 {strides = array<i32>} : memref<16x1xf32, #tpu.memory_space<vmem>>, vector<16x1xf32>,
    return
  }
  func.func @transform_0(%arg0: i32) -> (i32, i32) {
    %c0_i32 = arith.constant 0 : i32
    %c0_i32_0 = arith.constant 0 : i32
    return %arg0, %c0_i32 : i32, i32
  }
  func.func @transform_1(%arg0: i32) -> (i32, i32) {
    %c0_i32 = arith.constant 0 : i32
    %c0_i32_0 = arith.constant 0 : i32
    %c0_i32_1 = arith.constant 0 : i32
    return %c0_i32, %c0_i32_0 : i32, i32
  }
  func.func @transform_2(%arg0: i32) -> (i32, i32) {
    %c0_i32 = arith.constant 0 : i32
    %c0_i32_0 = arith.constant 0 : i32
    %c0_i32_1 = arith.constant 0 : i32
    return %c0_i32, %c0_i32_0 : i32, i32
  }
  func.func @transform_3(%arg0: i32) -> (i32, i32) {
    %c0_i32 = arith.constant 0 : i32
    %c0_i32_0 = arith.constant 0 : i32
    %c0_i32_1 = arith.constant 0 : i32
    return %c0_i32, %c0_i32_0 : i32, i32
  }
  func.func @transform_4(%arg0: i32) -> (i32, i32) {
    %c0_i32 = arith.constant 0 : i32
    %c0_i32_0 = arith.constant 0 : i32
    %c0_i32_1 = arith.constant 0 : i32
    return %c0_i32, %c0_i32_0 : i32, i32
  }
  func.func @transform_5(%arg0: i32) -> (i32, i32) {
    %c0_i32 = arith.constant 0 : i32
    %c0_i32_0 = arith.constant 0 : i32
    %c0_i32_1 = arith.constant 0 : i32
    return %c0_i32, %c0_i32_0 : i32, i32
  }
  func.func @transform_6(%arg0: i32) -> (i32, i32) {
    %c0_i32 = arith.constant 0 : i32
    %c0_i32_0 = arith.constant 0 : i32
    %c0_i32_1 = arith.constant 0 : i32
    return %c0_i32, %c0_i32_0 : i32, i32
  }
  func.func @transform_7(%arg0: i32) -> (i32, i32) {
    %c0_i32 = arith.constant 0 : i32
    %c0_i32_0 = arith.constant 0 : i32
    return %arg0, %c0_i32 : i32, i32
  }
}

</mosaic_0001>

<llo_original>
// kernel: tpu_custom_call.1
$region0: #{tpu_custom_call.1}
  #allocation0 [shape = 'u32[]', space=smem, size = 0x4, offset = 0x4, fixed_abs, tag = 'smem constant byte address 0x4 - core index']
  #allocation1 [shape = 'u32[144,128]{1,0:T(1,128)}', space=vmem, size = 0x12000, scoped, tag = 'internal scratch']
  #allocation2 [shape = 'f32[1,1]{1,0:T(1,128)S(6)}', space=smem, size = 0x200, scoped, tag = 'scoped memory for tpu_custom_call.1']
  %s0 = inlined_call_operand.hbm [shape: f32[8,256], index: 0, kind: input, shape index: {}]
  %s1 = inlined_call_operand.vmem [shape: bf16[256,128], index: 1, kind: input, shape index: {}]
  %s2 = inlined_call_operand.vmem [shape: f32[1,128], index: 2, kind: input, shape index: {}]
  %s3 = inlined_call_operand.vmem [shape: bf16[128,64], index: 3, kind: input, shape index: {}]
  %s4 = inlined_call_operand.vmem [shape: f32[1,64], index: 4, kind: input, shape index: {}]
  %s5 = inlined_call_operand.vmem [shape: bf16[64,1], index: 5, kind: input, shape index: {}]
  %s6 = inlined_call_operand.<no memory space> [shape: f32[1,1], index: 6, kind: input, shape index: {}]
  %s7 = inlined_call_operand.vmem [shape: f32[8,1], index: 7, kind: output, shape index: {}]
  %s8 = sld [smem:[#allocation0]]
  $region76: #{tpu_custom_call.1} parent=0
    _
  %s10 = ssub.s32 1, %s8
  %s11 = scalar_select 0, %s10, %s8
  %12 = sst [smem:[#allocation2]] %s6
  $region1: #{tpu_custom_call.1} parent=0
    #allocation3 [shape = 'u8[16384]{0}', space=vmem, size = 0x4000, scoped, tag = 'input window, operand 0, single buffered']
    #allocation4 [shape = 's32[1]{0}', space=sflag, size = 0x4, scoped, tag = 'scoped memory for tpu_custom_call.1']
    #allocation5 [shape = 'u8[8192]{0}', space=vmem, size = 0x2000, scoped, tag = 'output window, operand 0, single buffered']
    %13 = vsyncpa [#allocation4], 0
    // Predicated region
    $region2: #{tpu_custom_call.1} parent=1 // pred_check
      _
    $region3: #{tpu_custom_call.1} parent=1 // pred_check_branch
      %15 = sbr.rel (0) target = $region5
    $region4: #{tpu_custom_call.1} parent=1 // pred_region
      %s17 = ssub.s32 512, 256
      %18 = vsyncadd [#allocation4], %s17
      %s19 = sshll.u32 [#allocation3], 4
      %s20 = int_to_ptr.vmem [resolvable:$true] %s19
      %25 = dma.hbm_to_vmem [thread:$0]  %s0, 256, %s20, [#allocation4], 256, 256, 16
    $region5: #{tpu_custom_call.1} parent=1 // pred_fallthru
      _
    // Predicated region
    $region6: #{tpu_custom_call.1} parent=1 // pred_check
      _
    $region7: #{tpu_custom_call.1} parent=1 // pred_check_branch
      %27 = sbr.rel (0) target = $region9
    $region8: #{tpu_custom_call.1} parent=1 // pred_region
      _
    $region9: #{tpu_custom_call.1} parent=1 // pred_fallthru
      _
    // Predicated region
    $region10: #{tpu_custom_call.1} parent=1 // pred_check
      _
    $region11: #{tpu_custom_call.1} parent=1 // pred_check_branch
      %29 = sbr.rel (0) target = $region13
    $region12: #{tpu_custom_call.1} parent=1 // pred_region
      _
    $region13: #{tpu_custom_call.1} parent=1 // pred_fallthru
      _
    // Predicated region
    $region14: #{tpu_custom_call.1} parent=1 // pred_check
      _
    $region15: #{tpu_custom_call.1} parent=1 // pred_check_branch
      %31 = sbr.rel (0) target = $region17
    $region16: #{tpu_custom_call.1} parent=1 // pred_region
      _
    $region17: #{tpu_custom_call.1} parent=1 // pred_fallthru
      _
    // Predicated region
    $region18: #{tpu_custom_call.1} parent=1 // pred_check
      _
    $region19: #{tpu_custom_call.1} parent=1 // pred_check_branch
      %33 = sbr.rel (0) target = $region21
    $region20: #{tpu_custom_call.1} parent=1 // pred_region
      _
    $region21: #{tpu_custom_call.1} parent=1 // pred_fallthru
      _
    // Predicated region
    $region22: #{tpu_custom_call.1} parent=1 // pred_check
      _
    $region23: #{tpu_custom_call.1} parent=1 // pred_check_branch
      %35 = sbr.rel (0) target = $region25
    $region24: #{tpu_custom_call.1} parent=1 // pred_region
      _
    $region25: #{tpu_custom_call.1} parent=1 // pred_fallthru
      _
    // Predicated region
    $region26: #{tpu_custom_call.1} parent=1 // pred_check
      _
    $region27: #{tpu_custom_call.1} parent=1 // pred_check_branch
      %37 = sbr.rel (0) target = $region29
    $region28: #{tpu_custom_call.1} parent=1 // pred_region
      _
    $region29: #{tpu_custom_call.1} parent=1 // pred_fallthru
      _
    // Predicated region
    $region30: #{tpu_custom_call.1} parent=1 // pred_check
      _
    $region31: #{tpu_custom_call.1} parent=1 // pred_check_branch
      %39 = sbr.rel (0) target = $region33
    $region32: #{tpu_custom_call.1} parent=1 // pred_region
      %40 = dma.done [#allocation4], 512
    $region33: #{tpu_custom_call.1} parent=1 // pred_fallthru
      _
    %v42 = vld [vmem:[#allocation3] sm:$0xff]
    %v43 = vld [vmem:[#allocation3 + $0x8] sm:$0xff]
    %v44 = vld [vmem:[#allocation3 + $0x10] sm:$0xff]
    %v45 = vld [vmem:[#allocation3 + $0x18] sm:$0xff]
    %v46 = vpack.c.bf16 %v44, %v42
    %v47 = vpack.c.bf16 %v45, %v43
    %v48 = vld [vmem:[%s1] sm:$0xf]
    %v49 = vld [vmem:[%s1 + $0x4] sm:$0xf]
    %v50 = vld [vmem:[%s1 + $0x8] sm:$0xf]
    %v51 = vld [vmem:[%s1 + $0xc] sm:$0xf]
    %v52 = vld [vmem:[%s1 + $0x10] sm:$0xf]
    %v53 = vld [vmem:[%s1 + $0x14] sm:$0xf]
    %v54 = vld [vmem:[%s1 + $0x18] sm:$0xf]
    %v55 = vld [vmem:[%s1 + $0x1c] sm:$0xf]
    %v56 = vld [vmem:[%s1 + $0x20] sm:$0xf]
    %v57 = vld [vmem:[%s1 + $0x24] sm:$0xf]
    %v58 = vld [vmem:[%s1 + $0x28] sm:$0xf]
    %v59 = vld [vmem:[%s1 + $0x2c] sm:$0xf]
    %v60 = vld [vmem:[%s1 + $0x30] sm:$0xf]
    %v61 = vld [vmem:[%s1 + $0x34] sm:$0xf]
    %v62 = vld [vmem:[%s1 + $0x38] sm:$0xf]
    %v63 = vld [vmem:[%s1 + $0x3c] sm:$0xf]
    %v64 = vld [vmem:[%s1 + $0x40] sm:$0xf]
    %v65 = vld [vmem:[%s1 + $0x44] sm:$0xf]
    %v66 = vld [vmem:[%s1 + $0x48] sm:$0xf]
    %v67 = vld [vmem:[%s1 + $0x4c] sm:$0xf]
    %v68 = vld [vmem:[%s1 + $0x50] sm:$0xf]
    %v69 = vld [vmem:[%s1 + $0x54] sm:$0xf]
    %v70 = vld [vmem:[%s1 + $0x58] sm:$0xf]
    %v71 = vld [vmem:[%s1 + $0x5c] sm:$0xf]
    %v72 = vld [vmem:[%s1 + $0x60] sm:$0xf]
    %v73 = vld [vmem:[%s1 + $0x64] sm:$0xf]
    %v74 = vld [vmem:[%s1 + $0x68] sm:$0xf]
    %v75 = vld [vmem:[%s1 + $0x6c] sm:$0xf]
    %v76 = vld [vmem:[%s1 + $0x70] sm:$0xf]
    %v77 = vld [vmem:[%s1 + $0x74] sm:$0xf]
    %v78 = vld [vmem:[%s1 + $0x78] sm:$0xf]
    %v79 = vld [vmem:[%s1 + $0x7c] sm:$0xf]
    %v80 = vld [vmem:[%s2] sm:$0x1]
    %v82 = vlaneseq
    %v83 = vshrl.u32 %v82, 7
    %v84 = vsub.s32 0, %v83
    %v85 = vrot.slane %v80, %v84
    %v119 = vunpack.c.l.b16 %v48
    %v120 = vunpack.c.l.b16 %v49
    %v121 = vunpack.c.l.b16 %v50
    %v122 = vunpack.c.l.b16 %v51
    %v123 = vunpack.c.l.b16 %v52
    %v124 = vunpack.c.l.b16 %v53
    %v125 = vunpack.c.l.b16 %v54
    %v126 = vunpack.c.l.b16 %v55
    %v127 = vunpack.c.l.b16 %v56
    %v128 = vunpack.c.l.b16 %v57
    %v129 = vunpack.c.l.b16 %v58
    %v130 = vunpack.c.l.b16 %v59
    %v131 = vunpack.c.l.b16 %v60
    %v132 = vunpack.c.l.b16 %v61
    %v133 = vunpack.c.l.b16 %v62
    %v134 = vunpack.c.l.b16 %v63
    %v135 = vunpack.c.l.b16 %v64
    %v136 = vunpack.c.l.b16 %v65
    %v137 = vunpack.c.l.b16 %v66
    %v138 = vunpack.c.l.b16 %v67
    %v139 = vunpack.c.l.b16 %v68
    %v140 = vunpack.c.l.b16 %v69
    %v141 = vunpack.c.l.b16 %v70
    %v142 = vunpack.c.l.b16 %v71
    %v143 = vunpack.c.l.b16 %v72
    %v144 = vunpack.c.l.b16 %v73
    %v145 = vunpack.c.l.b16 %v74
    %v146 = vunpack.c.l.b16 %v75
    %v147 = vunpack.c.l.b16 %v76
    %v148 = vunpack.c.l.b16 %v77
    %v149 = vunpack.c.l.b16 %v78
    %v150 = vunpack.c.l.b16 %v79
    %v151 = vpack.c.b16 %v120, %v119
    %v152 = vpack.c.b16 %v122, %v121
    %v153 = vpack.c.b16 %v124, %v123
    %v154 = vpack.c.b16 %v126, %v125
    %v155 = vpack.c.b16 %v128, %v127
    %v156 = vpack.c.b16 %v130, %v129
    %v157 = vpack.c.b16 %v132, %v131
    %v158 = vpack.c.b16 %v134, %v133
    %v159 = vpack.c.b16 %v136, %v135
    %v160 = vpack.c.b16 %v138, %v137
    %v161 = vpack.c.b16 %v140, %v139
    %v162 = vpack.c.b16 %v142, %v141
    %v163 = vpack.c.b16 %v144, %v143
    %v164 = vpack.c.b16 %v146, %v145
    %v165 = vpack.c.b16 %v148, %v147
    %v166 = vpack.c.b16 %v150, %v149
    %183 = vmatprep.subr.bf16.mxu0 0
    %184 = vmatpush1.bf16.msra.mxu0 %v151
    %185 = vmatprep.subr.bf16.mxu0 0
    %186 = vmatpush1.bf16.msra.mxu0 %v152
    %187 = vmatprep.subr.bf16.mxu0 0
    %188 = vmatpush1.bf16.msra.mxu0 %v153
    %189 = vmatprep.subr.bf16.mxu0 0
    %190 = vmatpush1.bf16.msra.mxu0 %v154
    %191 = vmatprep.subr.bf16.mxu0 0
    %192 = vmatpush1.bf16.msra.mxu0 %v155
    %193 = vmatprep.subr.bf16.mxu0 0
    %194 = vmatpush1.bf16.msra.mxu0 %v156
    %195 = vmatprep.subr.bf16.mxu0 0
    %196 = vmatpush1.bf16.msra.mxu0 %v157
    %197 = vmatprep.subr.bf16.mxu0 0
    %198 = vmatpush1.bf16.msra.mxu0 %v158
    %199 = vmatprep.subr.bf16.mxu0 0
    %200 = vmatpush1.bf16.msra.mxu0 %v159
    %201 = vmatprep.subr.bf16.mxu0 0
    %202 = vmatpush1.bf16.msra.mxu0 %v160
    %203 = vmatprep.subr.bf16.mxu0 0
    %204 = vmatpush1.bf16.msra.mxu0 %v161
    %205 = vmatprep.subr.bf16.mxu0 0
    %206 = vmatpush1.bf16.msra.mxu0 %v162
    %207 = vmatprep.subr.bf16.mxu0 0
    %208 = vmatpush1.bf16.msra.mxu0 %v163
    %209 = vmatprep.subr.bf16.mxu0 0
    %210 = vmatpush1.bf16.msra.mxu0 %v164
    %211 = vmatprep.subr.bf16.mxu0 0
    %212 = vmatpush1.bf16.msra.mxu0 %v165
    %213 = vmatprep.subr.bf16.mxu0 0
    %214 = vmatpush1.bf16.msra.mxu0 %v166
    %215 = vmatprep.mubr.bf16.mxu0 %v47
    %216 = vmatmul.mubr.bf16.gmra.mrb[0].mxu0 %v46
    %v217 = vpop.f32.mrb[0].mxu0
    %v218 = vadd.f32 %v85, %v217
    %v219 = vpop.f32.mrb[0].mxu0
    %v220 = vpop.f32.mrb[0].mxu0
    %v221 = vadd.f32 %v85, %v220
    %v222 = vpop.f32.mrb[0].mxu0
    %223 = vdwg.mxu0
    %v224 = vmax.f32 %v218, 0.0
    %v225 = vmax.f32 %v221, 0.0
    %v226 = vpack.c.bf16 %v225, %v224
    %v227 = vld [vmem:[%s3] sm:$0xf]
    %v228 = vld [vmem:[%s3 + $0x4] sm:$0xf]
    %v229 = vld [vmem:[%s3 + $0x8] sm:$0xf]
    %v230 = vld [vmem:[%s3 + $0xc] sm:$0xf]
    %v231 = vld [vmem:[%s3 + $0x10] sm:$0xf]
    %v232 = vld [vmem:[%s3 + $0x14] sm:$0xf]
    %v233 = vld [vmem:[%s3 + $0x18] sm:$0xf]
    %v234 = vld [vmem:[%s3 + $0x1c] sm:$0xf]
    %v235 = vld [vmem:[%s3 + $0x20] sm:$0xf]
    %v236 = vld [vmem:[%s3 + $0x24] sm:$0xf]
    %v237 = vld [vmem:[%s3 + $0x28] sm:$0xf]
    %v238 = vld [vmem:[%s3 + $0x2c] sm:$0xf]
    %v239 = vld [vmem:[%s3 + $0x30] sm:$0xf]
    %v240 = vld [vmem:[%s3 + $0x34] sm:$0xf]
    %v241 = vld [vmem:[%s3 + $0x38] sm:$0xf]
    %v242 = vld [vmem:[%s3 + $0x3c] sm:$0xf]
    %v243 = vld [vmem:[%s4] sm:$0x1]
    %v245 = vlaneseq
    %v246 = vshrl.u32 %v245, 7
    %v247 = vsub.s32 0, %v246
    %v248 = vrot.slane %v243, %v247
    %v266 = vunpack.c.l.b16 %v227
    %v267 = vunpack.c.l.b16 %v228
    %v268 = vunpack.c.l.b16 %v229
    %v269 = vunpack.c.l.b16 %v230
    %v270 = vunpack.c.l.b16 %v231
    %v271 = vunpack.c.l.b16 %v232
    %v272 = vunpack.c.l.b16 %v233
    %v273 = vunpack.c.l.b16 %v234
    %v274 = vunpack.c.l.b16 %v235
    %v275 = vunpack.c.l.b16 %v236
    %v276 = vunpack.c.l.b16 %v237
    %v277 = vunpack.c.l.b16 %v238
    %v278 = vunpack.c.l.b16 %v239
    %v279 = vunpack.c.l.b16 %v240
    %v280 = vunpack.c.l.b16 %v241
    %v281 = vunpack.c.l.b16 %v242
    %v282 = vpack.c.b16 %v267, %v266
    %v283 = vpack.c.b16 %v269, %v268
    %v284 = vpack.c.b16 %v271, %v270
    %v285 = vpack.c.b16 %v273, %v272
    %v286 = vpack.c.b16 %v275, %v274
    %v287 = vpack.c.b16 %v277, %v276
    %v288 = vpack.c.b16 %v279, %v278
    %v289 = vpack.c.b16 %v281, %v280
    %298 = vmatprep.subr.bf16.mxu0 0
    %299 = vmatpush1.bf16.msra.mxu0 %v282
    %300 = vmatprep.subr.bf16.mxu0 0
    %301 = vmatpush1.bf16.msra.mxu0 %v283
    %302 = vmatprep.subr.bf16.mxu0 0
    %303 = vmatpush1.bf16.msra.mxu0 %v284
    %304 = vmatprep.subr.bf16.mxu0 0
    %305 = vmatpush1.bf16.msra.mxu0 %v285
    %306 = vmatprep.subr.bf16.mxu0 0
    %307 = vmatpush1.bf16.msra.mxu0 %v286
    %308 = vmatprep.subr.bf16.mxu0 0
    %309 = vmatpush1.bf16.msra.mxu0 %v287
    %310 = vmatprep.subr.bf16.mxu0 0
    %311 = vmatpush1.bf16.msra.mxu0 %v288
    %312 = vmatprep.subr.bf16.mxu0 0
    %313 = vmatpush1.bf16.msra.mxu0 %v289
    %314 = vmatprep.subr.bf16.mxu0 0
    %315 = vmatpush1.bf16.msra.mxu0 0
    %316 = vmatprep.subr.bf16.mxu0 0
    %317 = vmatpush1.bf16.msra.mxu0 0
    %318 = vmatprep.subr.bf16.mxu0 0
    %319 = vmatpush1.bf16.msra.mxu0 0
    %320 = vmatprep.subr.bf16.mxu0 0
    %321 = vmatpush1.bf16.msra.mxu0 0
    %322 = vmatprep.subr.bf16.mxu0 0
    %323 = vmatpush1.bf16.msra.mxu0 0
    %324 = vmatprep.subr.bf16.mxu0 0
    %325 = vmatpush1.bf16.msra.mxu0 0
    %326 = vmatprep.subr.bf16.mxu0 0
    %327 = vmatpush1.bf16.msra.mxu0 0
    %328 = vmatprep.subr.bf16.mxu0 0
    %329 = vmatpush1.bf16.msra.mxu0 0
    %330 = vmatprep.mubr.bf16.mxu0 0
    %331 = vmatmul.mubr.bf16.gmra.mrb[0].mxu0 %v226
    %v332 = vpop.f32.mrb[0].mxu0
    %v333 = vadd.f32 %v248, %v332
    %v334 = vpop.f32.mrb[0].mxu0
    %v335 = vpop.f32.mrb[0].mxu0
    %v336 = vadd.f32 %v248, %v335
    %v337 = vpop.f32.mrb[0].mxu0
    %338 = vdwg.mxu0
    %v339 = vmax.f32 %v333, 0.0
    %v340 = vmax.f32 %v336, 0.0
    %v341 = vpack.c.bf16 %v340, %v339
    %v342 = vld [vmem:[%s5] sm:$0xf]
    %v343 = vld [vmem:[%s5 + $0x4] sm:$0xf]
    %v344 = vld [vmem:[%s5 + $0x8] sm:$0xf]
    %v345 = vld [vmem:[%s5 + $0xc] sm:$0xf]
    %v346 = vld [vmem:[%s5 + $0x10] sm:$0xf]
    %v347 = vld [vmem:[%s5 + $0x14] sm:$0xf]
    %v348 = vld [vmem:[%s5 + $0x18] sm:$0xf]
    %v349 = vld [vmem:[%s5 + $0x1c] sm:$0xf]
    %s350 = sld [smem:[#allocation2]]
    %v351 = vstv %s350
    %v360 = vunpack.c.l.b16 %v342
    %v361 = vunpack.c.l.b16 %v343
    %v362 = vunpack.c.l.b16 %v344
    %v363 = vunpack.c.l.b16 %v345
    %v364 = vunpack.c.l.b16 %v346
    %v365 = vunpack.c.l.b16 %v347
    %v366 = vunpack.c.l.b16 %v348
    %v367 = vunpack.c.l.b16 %v349
    %v368 = vpack.c.b16 %v361, %v360
    %v369 = vpack.c.b16 %v363, %v362
    %v370 = vpack.c.b16 %v365, %v364
    %v371 = vpack.c.b16 %v367, %v366
    %vm376 = vcmask 523264
    %v378 = vsel %vm376, %v341, 0
    %380 = vmatprep.subr.bf16.mxu0 0
    %381 = vmatpush1.bf16.msra.mxu0 %v368
    %382 = vmatprep.subr.bf16.mxu0 0
    %383 = vmatpush1.bf16.msra.mxu0 %v369
    %384 = vmatprep.subr.bf16.mxu0 0
    %385 = vmatpush1.bf16.msra.mxu0 %v370
    %386 = vmatprep.subr.bf16.mxu0 0
    %387 = vmatpush1.bf16.msra.mxu0 %v371
    %388 = vmatprep.subr.bf16.mxu0 0
    %389 = vmatpush1.bf16.msra.mxu0 0
    %390 = vmatprep.subr.bf16.mxu0 0
    %391 = vmatpush1.bf16.msra.mxu0 0
    %392 = vmatprep.subr.bf16.mxu0 0
    %393 = vmatpush1.bf16.msra.mxu0 0
    %394 = vmatprep.subr.bf16.mxu0 0
    %395 = vmatpush1.bf16.msra.mxu0 0
    %396 = vmatprep.subr.bf16.mxu0 0
    %397 = vmatpush1.bf16.msra.mxu0 0
    %398 = vmatprep.subr.bf16.mxu0 0
    %399 = vmatpush1.bf16.msra.mxu0 0
    %400 = vmatprep.subr.bf16.mxu0 0
    %401 = vmatpush1.bf16.msra.mxu0 0
    %402 = vmatprep.subr.bf16.mxu0 0
    %403 = vmatpush1.bf16.msra.mxu0 0
    %404 = vmatprep.subr.bf16.mxu0 0
    %405 = vmatpush1.bf16.msra.mxu0 0
    %406 = vmatprep.subr.bf16.mxu0 0
    %407 = vmatpush1.bf16.msra.mxu0 0
    %408 = vmatprep.subr.bf16.mxu0 0
    %409 = vmatpush1.bf16.msra.mxu0 0
    %410 = vmatprep.subr.bf16.mxu0 0
    %411 = vmatpush1.bf16.msra.mxu0 0
    %412 = vmatprep.mubr.bf16.mxu0 0
    %413 = vmatmul.mubr.bf16.gmra.mrb[0].mxu0 %v378
    %v414 = vpop.f32.mrb[0].mxu0
    %v415 = vadd.f32 %v351, %v414
    %v416 = vpop.f32.mrb[0].mxu0
    %v417 = vpop.f32.mrb[0].mxu0
    %v418 = vadd.f32 %v351, %v417
    %v419 = vpop.f32.mrb[0].mxu0
    %420 = vdwg.mxu0
    %vm421 = vcmask 7168
    %422 = vst.msk [vmem:[#allocation5] sm:$0xff] %vm421, %v415
    %423 = vst.msk [vmem:[#allocation5 + $0x8] sm:$0xff] %vm421, %v418
    // Predicated region
    $region34: #{tpu_custom_call.1} parent=1 // pred_check
      _
    $region35: #{tpu_custom_call.1} parent=1 // pred_check_branch
      %425 = sbr.rel (0) target = $region37
    $region36: #{tpu_custom_call.1} parent=1 // pred_region
      // Predicated region
      $region38: #{tpu_custom_call.1} parent=36 // pred_check
        _
      $region39: #{tpu_custom_call.1} parent=36 // pred_check_branch
        %427 = sbr.rel (0) target = $region41
      $region40: #{tpu_custom_call.1} parent=36 // pred_region
        // Predicated region
        $region42: #{tpu_custom_call.1} parent=40 // pred_check
          _
        $region43: #{tpu_custom_call.1} parent=40 // pred_check_branch
          %429 = sbr.rel (0) target = $region45
        $region44: #{tpu_custom_call.1} parent=40 // pred_region
          // Predicated region
          $region57: #{tpu_custom_call.1} parent=44 // pred_check
            _
          $region58: #{tpu_custom_call.1} parent=44 // pred_check_branch
            %444 = sbr.rel (0) target = $region60
          $region59: #{tpu_custom_call.1} parent=44 // pred_region
            loop: start=0, step=1, limit=1
            $region61: #{tpu_custom_call.1} parent=59 // loop_pre_header
              _
            $region62: #{tpu_custom_call.1} parent=59 // loop_header
              %s446 = sphi 0, %s450
              %p447 = scmp.ge.s32.totalorder %s446, 1
              %s451 = sphi [#allocation5], [#allocation5]
              %s452 = sphi %s7, %s7
            $region63: #{tpu_custom_call.1} parent=59 // loop_header_branch
              %449 = sbr.rel (%p447) target = $region67
            $region64: #{tpu_custom_call.1} parent=59 // loop_body
              %v453 = vld [vmem:[%s451] sm:$0xff]
              %454 = vst [vmem:[%s452] sm:$0xff] %v453
            $region65: #{tpu_custom_call.1} parent=59 // loop_footer
              %s450 = sadd.s32 1, %s446
            $region66: #{tpu_custom_call.1} parent=59 // loop_footer_branch
              %445 = sbr.rel target = $region62
            $region67: #{tpu_custom_call.1} parent=59 // loop_exit
              _
          $region60: #{tpu_custom_call.1} parent=44 // pred_fallthru
            _
          // Predicated region
          $region68: #{tpu_custom_call.1} parent=44 // pred_check
            _
          $region69: #{tpu_custom_call.1} parent=44 // pred_check_branch
            %456 = sbr.rel target = $region71
          $region70: #{tpu_custom_call.1} parent=44 // pred_region
            _
          $region71: #{tpu_custom_call.1} parent=44 // pred_fallthru
            _
        $region45: #{tpu_custom_call.1} parent=40 // pred_fallthru
          _
        // Predicated region
        $region46: #{tpu_custom_call.1} parent=40 // pred_check
          _
        $region47: #{tpu_custom_call.1} parent=40 // pred_check_branch
          %431 = sbr.rel target = $region49
        $region48: #{tpu_custom_call.1} parent=40 // pred_region
          loop: start=0, step=1, limit=1
          $region50: #{tpu_custom_call.1} parent=48 // loop_pre_header
            _
          $region51: #{tpu_custom_call.1} parent=48 // loop_header
            %s434 = sphi 0, %s438
            %p435 = scmp.ge.s32.totalorder %s434, 1
            %s439 = sphi [#allocation5], [#allocation5]
            %s440 = sphi %s7, %s7
          $region52: #{tpu_custom_call.1} parent=48 // loop_header_branch
            %437 = sbr.rel (%p435) target = $region56
          $region53: #{tpu_custom_call.1} parent=48 // loop_body
            %v441 = vld [vmem:[%s439] sm:$0xff]
            %442 = vst [vmem:[%s440] sm:$0xff] %v441
          $region54: #{tpu_custom_call.1} parent=48 // loop_footer
            %s438 = sadd.s32 1, %s434
          $region55: #{tpu_custom_call.1} parent=48 // loop_footer_branch
            %433 = sbr.rel target = $region51
          $region56: #{tpu_custom_call.1} parent=48 // loop_exit
            _
        $region49: #{tpu_custom_call.1} parent=40 // pred_fallthru
          _
      $region41: #{tpu_custom_call.1} parent=36 // pred_fallthru
        _
      %457 = vnop
    $region37: #{tpu_custom_call.1} parent=1 // pred_fallthru
      _
    // Predicated region
    $region72: #{tpu_custom_call.1} parent=1 // pred_check
      _
    $region73: #{tpu_custom_call.1} parent=1 // pred_check_branch
      %459 = sbr.rel (0) target = $region75
    $region74: #{tpu_custom_call.1} parent=1 // pred_region
      _
    $region75: #{tpu_custom_call.1} parent=1 // pred_fallthru
      _
    %460 = vsyncpa [#allocation4], 1

</llo_original>
